<compile_context>
chip_gen: v7x
topology: tpu7x:2x2x1
jax: 0.10.0
libtpu: 0.0.40
codegen_flags: <defaults>
</compile_context>

<pallas_src>
import jax
import jax.numpy as jnp
from jax.experimental import pallas as pl
from jax.experimental.pallas import tpu as pltpu


_NEG_BIG = -1e30  # acts as -inf for padded softmax lanes (exp underflows to 0)


# ----------------------------------------------------------------------------
# Pallas kernel: fused  x @ W1 + b1 -> ReLU -> @ W3 + b3 -> softmax(axis=-1)
# ----------------------------------------------------------------------------
def _mlp_softmax_kernel(x_ref, w1_ref, b1_ref, w3_ref, b3_ref, o_ref):
    # First linear + bias + ReLU (f32 accumulation on the MXU).
    h = jnp.dot(x_ref[...], w1_ref[...], preferred_element_type=jnp.float32)
    h = jnp.maximum(h + b1_ref[...], 0.0)

    # Second linear + bias (output lanes are padded to 128 -> full-lane MXU
    # result and unmasked stores).
    logits = jnp.dot(h.astype(w3_ref.dtype), w3_ref[...],
                     preferred_element_type=jnp.float32)
    logits = logits + b3_ref[...]

    # Numerically stable softmax along the class axis (lanes).  Padded lanes
    # carry a -1e30 bias, so exp() underflows to 0 and they do not perturb
    # the denominator.
    m = jnp.max(logits, axis=-1, keepdims=True)
    e = jnp.exp(logits - m)
    denom = jnp.sum(e, axis=-1, keepdims=True)
    # Exact reciprocal on the EUP slot instead of a VPU divide sequence.
    o_ref[...] = (e * pl.reciprocal(denom, approx=False)).astype(o_ref.dtype)


# ----------------------------------------------------------------------------
# Wrapper helpers
# ----------------------------------------------------------------------------
def _round_up(x, m):
    return ((x + m - 1) // m) * m


def _vmem_cap_bytes():
    """Generation-aware VMEM cap: leave headroom (v7x has only 64 MiB)."""
    try:
        info = pltpu.get_tpu_info()
        return min(int(info.vmem_capacity_bytes) * 3 // 4, 100 << 20)
    except Exception:  # attribute/name differences across versions
        return 48 << 20


# ----------------------------------------------------------------------------
# Wrapper
# ----------------------------------------------------------------------------
def outlier_forward(x, params, *, row_tile=512):
    """x: (B, input_size) -> (B, num_classes**2) softmax probabilities."""
    w1, b1 = params["w1"], params["b1"]        # (D, H), (H,)
    w3, b3 = params["w3"], params["b3"]        # (H, K), (K,)
    B, D = x.shape
    H = w1.shape[1]
    K = w3.shape[1]

    # --- lane-dense layouts --------------------------------------------------
    # Pad contraction dim D and class dim K up to multiples of 128 lanes.
    # (In production, do this once at model setup rather than per call.)
    Dp = _round_up(D, 128)
    Kp = _round_up(K, 128)
    if Dp != D:
        x = jnp.pad(x, ((0, 0), (0, Dp - D)))
        w1 = jnp.pad(w1, ((0, Dp - D), (0, 0)))
    if Kp != K:
        w3 = jnp.pad(w3, ((0, 0), (0, Kp - K)))
        b3 = jnp.pad(b3, ((0, Kp - K),), constant_values=_NEG_BIG)

    # --- row tiling ------------------------------------------------------------
    tm = _round_up(min(row_tile, _round_up(B, 8)), 8)
    if tm >= 256:
        tm = _round_up(tm, 256)  # match the 256x256 MXU on v6e/v7x
    if B >= 512 and _round_up(B, tm) // tm < 2:
        # Keep >=2 grid steps so dimension_semantics=("parallel",) can shard
        # rows across v7x's 2 TensorCores (no-op on v5e/v6e).
        tm = max(256, _round_up(pl.cdiv(B, 2), 256))
    bp = _round_up(B, tm)
    if bp != B:
        x = jnp.pad(x, ((0, bp - B), (0, 0)))   # junk rows sliced off below
    grid = (bp // tm,)

    b1r = b1.reshape(1, H)
    b3r = b3.reshape(1, Kp)

    # --- VMEM budget (computed, not hard-coded) --------------------------------
    x_bytes = jnp.dtype(x.dtype).itemsize
    w_bytes = jnp.dtype(w1.dtype).itemsize
    resident_bytes = (Dp * H + H + H * Kp + Kp) * w_bytes        # single-buffered
    pipelined_bytes = 2 * tm * (Dp + Kp) * x_bytes               # x in + out tiles
    need = int((resident_bytes + pipelined_bytes) * 1.5) + (4 << 20)
    vmem_limit = max(32 << 20, min(need, _vmem_cap_bytes()))

    def _call(single_buffer_weights):
        resident_kw = {}
        if single_buffer_weights and hasattr(pl, "Buffered"):
            # Grid-invariant operands: one VMEM buffer instead of two.
            resident_kw = dict(pipeline_mode=pl.Buffered(1))
        in_specs = [
            pl.BlockSpec((tm, Dp), lambda i: (i, 0)),               # x (streamed)
            pl.BlockSpec((Dp, H), lambda i: (0, 0), **resident_kw),  # W1 resident
            pl.BlockSpec((1, H), lambda i: (0, 0), **resident_kw),   # b1
            pl.BlockSpec((H, Kp), lambda i: (0, 0), **resident_kw),  # W3 resident
            pl.BlockSpec((1, Kp), lambda i: (0, 0), **resident_kw),  # b3
        ]
        return pl.pallas_call(
            _mlp_softmax_kernel,
            out_shape=jax.ShapeDtypeStruct((bp, Kp), x.dtype),
            grid=grid,
            in_specs=in_specs,
            out_specs=pl.BlockSpec((tm, Kp), lambda i: (i, 0)),
            compiler_params=pltpu.CompilerParams(
                dimension_semantics=("parallel",),
                vmem_limit_bytes=vmem_limit,
            ),
        )(x, w1, b1r, w3, b3r)

    try:
        out = _call(True)
    except Exception:
        # Fallback for jax versions where Buffered(1) single-buffering on a
        # top-level BlockSpec is not supported.
        out = _call(False)

    return out[:B, :K]


# ----------------------------------------------------------------------------
# Pure-JAX reference (matches the PyTorch module semantics)
# ----------------------------------------------------------------------------
def _ref_forward(x, params):
    h = jnp.maximum(x @ params["w1"] + params["b1"], 0.0)
    logits = h @ params["w3"] + params["b3"]
    return jax.nn.softmax(logits, axis=-1)     # F.softmax on 2-D -> dim=1


# ----------------------------------------------------------------------------
# Deterministic parameter init (xavier_uniform weights, PyTorch-style biases)
# ----------------------------------------------------------------------------
def _init_params(key, input_size, hidden_size, num_classes):
    k1, k2, k3, k4 = jax.random.split(key, 4)
    out_size = num_classes ** 2

    def xavier(k, fan_in, fan_out):
        bound = (6.0 / (fan_in + fan_out)) ** 0.5
        # stored already transposed for x @ W
        return jax.random.uniform(k, (fan_in, fan_out), jnp.float32,
                                  -bound, bound)

    def bias(k, fan_in, n):
        bound = 1.0 / (fan_in ** 0.5)
        return jax.random.uniform(k, (n,), jnp.float32, -bound, bound)

    return {
        "w1": xavier(k1, input_size, hidden_size),
        "b1": bias(k2, input_size, hidden_size),
        "w3": xavier(k3, hidden_size, out_size),
        "b3": bias(k4, hidden_size, out_size),
    }


if __name__ == "__main__":
    key = jax.random.PRNGKey(0)
    k_x1, k_x2, k_p = jax.random.split(key, 3)

    input_size, hidden_size, num_classes = 32, 32, 4   # K = num_classes**2 = 16
    params = _init_params(k_p, input_size, hidden_size, num_classes)

    # Case 1: batch that exercises a multi-step grid (row_tile=16 -> grid=(4,)).
    x1 = jax.random.normal(k_x1, (64, input_size), jnp.float32)
    out1 = jax.block_until_ready(outlier_forward(x1, params, row_tile=16))
    ref1 = jax.block_until_ready(_ref_forward(x1, params))
    assert out1.shape == ref1.shape, (out1.shape, ref1.shape)
    err1 = float(jnp.max(jnp.abs(out1 - ref1)))
    assert err1 < 1e-5, f"grid case: max abs err {err1}"

    # Case 2: ragged batch (needs sublane padding) with the default large tile.
    x2 = jax.random.normal(k_x2, (10, input_size), jnp.float32)
    out2 = jax.block_until_ready(outlier_forward(x2, params))
    ref2 = jax.block_until_ready(_ref_forward(x2, params))
    assert out2.shape == ref2.shape, (out2.shape, ref2.shape)
    err2 = float(jnp.max(jnp.abs(out2 - ref2)))
    assert err2 < 1e-5, f"padded case: max abs err {err2}"

    print("KERNEL_OK")
</pallas_src>

<mosaic_0001>
module attributes {stable_mosaic.version = 11 : i64} {
  func.func @_mlp_softmax_kernel(%arg0: i32, %arg1: memref<16x128xf32, #tpu.memory_space<vmem>>, %arg2: memref<128x32xf32, #tpu.memory_space<vmem>>, %arg3: memref<1x32xf32, #tpu.memory_space<vmem>>, %arg4: memref<32x128xf32, #tpu.memory_space<vmem>>, %arg5: memref<1x128xf32, #tpu.memory_space<vmem>>, %arg6: memref<16x128xf32, #tpu.memory_space<vmem>>) attributes {dimension_semantics = [#tpu.dimension_semantics<parallel>], iteration_bounds = array<i64: 4>, scalar_prefetch = 0 : i64, scratch_operands = 0 : i64, tpu.core_type = #tpu.core_type<tc>, window_params = [{transform_indices = @transform_0, window_bounds = array<i64: 16, 128>}, {pipeline_mode = #tpu.pipeline_mode<synchronous>, transform_indices = @transform_1, window_bounds = array<i64: 128, 32>}, {pipeline_mode = #tpu.pipeline_mode<synchronous>, transform_indices = @transform_2, window_bounds = array<i64: 1, 32>}, {pipeline_mode = #tpu.pipeline_mode<synchronous>, transform_indices = @transform_3, window_bounds = array<i64: 32, 128>}, {pipeline_mode = #tpu.pipeline_mode<synchronous>, transform_indices = @transform_4, window_bounds = array<i64: 1, 128>}, {transform_indices = @transform_5, window_bounds = array<i64: 16, 128>}]} {
    %c0 = arith.constant 0 : index
    %c0_0 = arith.constant 0 : index
    %0 = vector.load %arg1[%c0, %c0_0] : memref<16x128xf32, #tpu.memory_space<vmem>>, vector<16x128xf32>
    %c0_1 = arith.constant 0 : index
    %c0_2 = arith.constant 0 : index
    %1 = vector.load %arg2[%c0_1, %c0_2] : memref<128x32xf32, #tpu.memory_space<vmem>>, vector<128x32xf32>
    %cst = arith.constant dense<0.000000e+00> : vector<16x32xf32>
    %2 = tpu.matmul %0, %1, %cst {dimension_numbers = #tpu.dot_dimension_numbers<[1], [0], [0], [1], [0, 0, 1, 1], [], []>} : vector<16x128xf32>, vector<128x32xf32>, vector<16x32xf32> -> vector<16x32xf32>
    %c0_3 = arith.constant 0 : index
    %c0_4 = arith.constant 0 : index
    %3 = vector.load %arg3[%c0_3, %c0_4] : memref<1x32xf32, #tpu.memory_space<vmem>>, vector<1x32xf32>
    %4 = vector.broadcast %3 : vector<1x32xf32> to vector<16x32xf32>
    %5 = arith.addf %2, %4 : vector<16x32xf32>
    %cst_5 = arith.constant 0.000000e+00 : f32
    %6 = vector.broadcast %cst_5 : f32 to vector<16x32xf32>
    %7 = arith.maximumf %5, %6 : vector<16x32xf32>
    %c0_6 = arith.constant 0 : index
    %c0_7 = arith.constant 0 : index
    %8 = vector.load %arg4[%c0_6, %c0_7] : memref<32x128xf32, #tpu.memory_space<vmem>>, vector<32x128xf32>
    %cst_8 = arith.constant dense<0.000000e+00> : vector<16x128xf32>
    %9 = tpu.matmul %7, %8, %cst_8 {dimension_numbers = #tpu.dot_dimension_numbers<[1], [0], [0], [1], [0, 0, 1, 1], [], []>} : vector<16x32xf32>, vector<32x128xf32>, vector<16x128xf32> -> vector<16x128xf32>
    %c0_9 = arith.constant 0 : index
    %c0_10 = arith.constant 0 : index
    %10 = vector.load %arg5[%c0_9, %c0_10] : memref<1x128xf32, #tpu.memory_space<vmem>>, vector<1x128xf32>
    %11 = vector.broadcast %10 : vector<1x128xf32> to vector<16x128xf32>
    %12 = arith.addf %9, %11 : vector<16x128xf32>
    %cst_11 = arith.constant dense<0xFF800000> : vector<16xf32>
    %13 = vector.multi_reduction <maximumf>, %12, %cst_11 [1] : vector<16x128xf32> to vector<16xf32>
    %14 = vector.shape_cast %13 : vector<16xf32> to vector<16x1xf32>
    %15 = vector.broadcast %14 : vector<16x1xf32> to vector<16x128xf32>
    %16 = arith.subf %12, %15 : vector<16x128xf32>
    %17 = math.exp %16 : vector<16x128xf32>
    %cst_12 = arith.constant dense<0.000000e+00> : vector<16xf32>
    %18 = vector.multi_reduction <add>, %17, %cst_12 [1] : vector<16x128xf32> to vector<16xf32>
    %19 = vector.shape_cast %18 : vector<16xf32> to vector<16x1xf32>
    %20 = tpu.reciprocal %19 : vector<16x1xf32> -> vector<16x1xf32>
    %21 = vector.broadcast %20 : vector<16x1xf32> to vector<16x128xf32>
    %22 = arith.mulf %17, %21 : vector<16x128xf32>
    %c0_13 = arith.constant 0 : index
    %c0_14 = arith.constant 0 : index
    %23 = vector.load %arg6[%c0_13, %c0_14] : memref<16x128xf32, #tpu.memory_space<vmem>>, vector<16x128xf32>
    tpu.vector_store %arg6[%c0_13, %c0_14], %22 {strides = array<i32>} : memref<16x128xf32, #tpu.memory_space<vmem>>, vector<16x128xf32>,
    return
  }
  func.func @transform_0(%arg0: i32) -> (i32, i32) {
    %c0_i32 = arith.constant 0 : i32
    %c0_i32_0 = arith.constant 0 : i32
    return %arg0, %c0_i32 : i32, i32
  }
  func.func @transform_1(%arg0: i32) -> (i32, i32) {
    %c0_i32 = arith.constant 0 : i32
    %c0_i32_0 = arith.constant 0 : i32
    %c0_i32_1 = arith.constant 0 : i32
    return %c0_i32, %c0_i32_0 : i32, i32
  }
  func.func @transform_2(%arg0: i32) -> (i32, i32) {
    %c0_i32 = arith.constant 0 : i32
    %c0_i32_0 = arith.constant 0 : i32
    %c0_i32_1 = arith.constant 0 : i32
    return %c0_i32, %c0_i32_0 : i32, i32
  }
  func.func @transform_3(%arg0: i32) -> (i32, i32) {
    %c0_i32 = arith.constant 0 : i32
    %c0_i32_0 = arith.constant 0 : i32
    %c0_i32_1 = arith.constant 0 : i32
    return %c0_i32, %c0_i32_0 : i32, i32
  }
  func.func @transform_4(%arg0: i32) -> (i32, i32) {
    %c0_i32 = arith.constant 0 : i32
    %c0_i32_0 = arith.constant 0 : i32
    %c0_i32_1 = arith.constant 0 : i32
    return %c0_i32, %c0_i32_0 : i32, i32
  }
  func.func @transform_5(%arg0: i32) -> (i32, i32) {
    %c0_i32 = arith.constant 0 : i32
    %c0_i32_0 = arith.constant 0 : i32
    return %arg0, %c0_i32 : i32, i32
  }
}

module attributes {stable_mosaic.version = 11 : i64} {
  func.func @_mlp_softmax_kernel(%arg0: i32, %arg1: memref<16x128xf32, #tpu.memory_space<vmem>>, %arg2: memref<128x32xf32, #tpu.memory_space<vmem>>, %arg3: memref<1x32xf32, #tpu.memory_space<vmem>>, %arg4: memref<32x128xf32, #tpu.memory_space<vmem>>, %arg5: memref<1x128xf32, #tpu.memory_space<vmem>>, %arg6: memref<16x128xf32, #tpu.memory_space<vmem>>) attributes {dimension_semantics = [#tpu.dimension_semantics<parallel>], iteration_bounds = array<i64: 4>, scalar_prefetch = 0 : i64, scratch_operands = 0 : i64, tpu.core_type = #tpu.core_type<tc>, window_params = [{transform_indices = @transform_0, window_bounds = array<i64: 16, 128>}, {pipeline_mode = #tpu.pipeline_mode<synchronous>, transform_indices = @transform_1, window_bounds = array<i64: 128, 32>}, {pipeline_mode = #tpu.pipeline_mode<synchronous>, transform_indices = @transform_2, window_bounds = array<i64: 1, 32>}, {pipeline_mode = #tpu.pipeline_mode<synchronous>, transform_indices = @transform_3, window_bounds = array<i64: 32, 128>}, {pipeline_mode = #tpu.pipeline_mode<synchronous>, transform_indices = @transform_4, window_bounds = array<i64: 1, 128>}, {transform_indices = @transform_5, window_bounds = array<i64: 16, 128>}]} {
    %c0 = arith.constant 0 : index
    %c0_0 = arith.constant 0 : index
    %0 = vector.load %arg1[%c0, %c0_0] : memref<16x128xf32, #tpu.memory_space<vmem>>, vector<16x128xf32>
    %c0_1 = arith.constant 0 : index
    %c0_2 = arith.constant 0 : index
    %1 = vector.load %arg2[%c0_1, %c0_2] : memref<128x32xf32, #tpu.memory_space<vmem>>, vector<128x32xf32>
    %cst = arith.constant dense<0.000000e+00> : vector<16x32xf32>
    %2 = tpu.matmul %0, %1, %cst {dimension_numbers = #tpu.dot_dimension_numbers<[1], [0], [0], [1], [0, 0, 1, 1], [], []>} : vector<16x128xf32>, vector<128x32xf32>, vector<16x32xf32> -> vector<16x32xf32>
    %c0_3 = arith.constant 0 : index
    %c0_4 = arith.constant 0 : index
    %3 = vector.load %arg3[%c0_3, %c0_4] : memref<1x32xf32, #tpu.memory_space<vmem>>, vector<1x32xf32>
    %4 = vector.broadcast %3 : vector<1x32xf32> to vector<16x32xf32>
    %5 = arith.addf %2, %4 : vector<16x32xf32>
    %cst_5 = arith.constant 0.000000e+00 : f32
    %6 = vector.broadcast %cst_5 : f32 to vector<16x32xf32>
    %7 = arith.maximumf %5, %6 : vector<16x32xf32>
    %c0_6 = arith.constant 0 : index
    %c0_7 = arith.constant 0 : index
    %8 = vector.load %arg4[%c0_6, %c0_7] : memref<32x128xf32, #tpu.memory_space<vmem>>, vector<32x128xf32>
    %cst_8 = arith.constant dense<0.000000e+00> : vector<16x128xf32>
    %9 = tpu.matmul %7, %8, %cst_8 {dimension_numbers = #tpu.dot_dimension_numbers<[1], [0], [0], [1], [0, 0, 1, 1], [], []>} : vector<16x32xf32>, vector<32x128xf32>, vector<16x128xf32> -> vector<16x128xf32>
    %c0_9 = arith.constant 0 : index
    %c0_10 = arith.constant 0 : index
    %10 = vector.load %arg5[%c0_9, %c0_10] : memref<1x128xf32, #tpu.memory_space<vmem>>, vector<1x128xf32>
    %11 = vector.broadcast %10 : vector<1x128xf32> to vector<16x128xf32>
    %12 = arith.addf %9, %11 : vector<16x128xf32>
    %cst_11 = arith.constant dense<0xFF800000> : vector<16xf32>
    %13 = vector.multi_reduction <maximumf>, %12, %cst_11 [1] : vector<16x128xf32> to vector<16xf32>
    %14 = vector.shape_cast %13 : vector<16xf32> to vector<16x1xf32>
    %15 = vector.broadcast %14 : vector<16x1xf32> to vector<16x128xf32>
    %16 = arith.subf %12, %15 : vector<16x128xf32>
    %17 = math.exp %16 : vector<16x128xf32>
    %cst_12 = arith.constant dense<0.000000e+00> : vector<16xf32>
    %18 = vector.multi_reduction <add>, %17, %cst_12 [1] : vector<16x128xf32> to vector<16xf32>
    %19 = vector.shape_cast %18 : vector<16xf32> to vector<16x1xf32>
    %20 = tpu.reciprocal %19 : vector<16x1xf32> -> vector<16x1xf32>
    %21 = vector.broadcast %20 : vector<16x1xf32> to vector<16x128xf32>
    %22 = arith.mulf %17, %21 : vector<16x128xf32>
    %c0_13 = arith.constant 0 : index
    %c0_14 = arith.constant 0 : index
    %23 = vector.load %arg6[%c0_13, %c0_14] : memref<16x128xf32, #tpu.memory_space<vmem>>, vector<16x128xf32>
    tpu.vector_store %arg6[%c0_13, %c0_14], %22 {strides = array<i32>} : memref<16x128xf32, #tpu.memory_space<vmem>>, vector<16x128xf32>,
    return
  }
  func.func @transform_0(%arg0: i32) -> (i32, i32) {
    %c0_i32 = arith.constant 0 : i32
    %c0_i32_0 = arith.constant 0 : i32
    return %arg0, %c0_i32 : i32, i32
  }
  func.func @transform_1(%arg0: i32) -> (i32, i32) {
    %c0_i32 = arith.constant 0 : i32
    %c0_i32_0 = arith.constant 0 : i32
    %c0_i32_1 = arith.constant 0 : i32
    return %c0_i32, %c0_i32_0 : i32, i32
  }
  func.func @transform_2(%arg0: i32) -> (i32, i32) {
    %c0_i32 = arith.constant 0 : i32
    %c0_i32_0 = arith.constant 0 : i32
    %c0_i32_1 = arith.constant 0 : i32
    return %c0_i32, %c0_i32_0 : i32, i32
  }
  func.func @transform_3(%arg0: i32) -> (i32, i32) {
    %c0_i32 = arith.constant 0 : i32
    %c0_i32_0 = arith.constant 0 : i32
    %c0_i32_1 = arith.constant 0 : i32
    return %c0_i32, %c0_i32_0 : i32, i32
  }
  func.func @transform_4(%arg0: i32) -> (i32, i32) {
    %c0_i32 = arith.constant 0 : i32
    %c0_i32_0 = arith.constant 0 : i32
    %c0_i32_1 = arith.constant 0 : i32
    return %c0_i32, %c0_i32_0 : i32, i32
  }
  func.func @transform_5(%arg0: i32) -> (i32, i32) {
    %c0_i32 = arith.constant 0 : i32
    %c0_i32_0 = arith.constant 0 : i32
    return %arg0, %c0_i32 : i32, i32
  }
}

</mosaic_0001>

<llo_original>
// kernel: tpu_custom_call.1
$region0: #{tpu_custom_call.1}
  #allocation0 [shape = 'u32[]', space=smem, size = 0x4, offset = 0x4, fixed_abs, tag = 'smem constant byte address 0x4 - core index']
  #allocation1 [shape = 'u32[144,128]{1,0:T(1,128)}', space=vmem, size = 0x12000, scoped, tag = 'internal scratch']
  %s0 = inlined_call_operand.vmem [shape: f32[64,128], index: 0, kind: input, shape index: {}]
  %s1 = inlined_call_operand.vmem [shape: f32[128,32], index: 1, kind: input, shape index: {}]
  %s2 = inlined_call_operand.vmem [shape: f32[1,32], index: 2, kind: input, shape index: {}]
  %s3 = inlined_call_operand.vmem [shape: f32[32,128], index: 3, kind: input, shape index: {}]
  %s4 = inlined_call_operand.vmem [shape: f32[1,128], index: 4, kind: input, shape index: {}]
  %s5 = inlined_call_operand.hbm [shape: f32[64,128], index: 5, kind: output, shape index: {}]
  %s6 = sld [smem:[#allocation0]]
  $region53: #{tpu_custom_call.1} parent=0
    _
  %s8 = ssub.s32 1, %s6
  %s9 = scalar_select 0, %s8, %s6
  $region1: #{tpu_custom_call.1} parent=0
    #allocation2 [shape = 'u8[16384]{0}', space=vmem, size = 0x4000, scoped, tag = 'output window, operand 0']
    #allocation3 [shape = 's32[2]{0}', space=sflag, size = 0x8, scoped, tag = 'scoped memory for tpu_custom_call.1']
    %10 = vsyncpa [#allocation3], 0
    %s11 = scalar_lea.sflag [#allocation3], 1
    %12 = vsyncpa %s11, 0
    loop: start=0, step=1, limit=6
    $region2: #{tpu_custom_call.1} parent=1 // loop_pre_header
      _
    $region3: #{tpu_custom_call.1} parent=1 // loop_header
      %s14 = sphi 0, %s18
      %p15 = scmp.ge.s32.totalorder %s14, 6
      %s24 = sphi 0, %s26
      %s27 = sphi 0, %s24
      %s28 = sphi 0, %s27
      %s44 = sphi 0, %s28
      %s48 = sphi 0, %s48
      %s50 = sphi 0, %s48
      %s51 = sphi 0, %s50
      %s65 = sphi 0, %s51
      %s69 = sphi 0, %s69
      %s71 = sphi 0, %s69
      %s72 = sphi 0, %s71
      %s86 = sphi 0, %s72
      %s90 = sphi 0, %s90
      %s92 = sphi 0, %s90
      %s93 = sphi 0, %s92
      %s107 = sphi 0, %s93
      %s111 = sphi 0, %s111
      %s113 = sphi 0, %s111
      %s114 = sphi 0, %s113
      %s128 = sphi 0, %s114
      %s134 = sphi 0, %s136
      %s137 = sphi 0, %s134
      %s138 = sphi 0, %s137
      %s154 = sphi 0, %s138
    $region4: #{tpu_custom_call.1} parent=1 // loop_header_branch
      %17 = sbr.rel (%p15) target = $region8
    $region5: #{tpu_custom_call.1} parent=1 // loop_body
      %s19 = ssub.s32 %s14, 1
      %s20 = ssub.s32 %s14, 2
      %s21 = sadd.s32 %s14, 1
      %s22 = ssub.s32 %s14, %s21
      %p23 = scmp.eq.s32.totalorder %s22, 0
      %s25 = sadd.s32 %s24, 1
      %s26 = scalar_select %p23, %s24, %s25
      %p29 = pneg %p23
      %p30 = scmp.eq.s32.totalorder %s14, 3
      %p31 = por %p29, %p30
      %p32 = scmp.ne.s32.totalorder %s24, %s27
      %p33 = scmp.eq.s32.totalorder %s14, 0
      %p34 = por %p32, %p33
      %p35 = scmp.ne.s32.totalorder %s24, %s27
      %p36 = scmp.eq.s32.totalorder %s19, 3
      %p37 = por %p35, %p36
      %p38 = scmp.ne.s32.totalorder %s27, %s28
      %p39 = scmp.eq.s32.totalorder %s19, 0
      %p40 = por %p38, %p39
      %p41 = scmp.ne.s32.totalorder %s27, %s28
      %p42 = scmp.eq.s32.totalorder %s20, 3
      %p43 = por %p41, %p42
      %p45 = scmp.ne.s32.totalorder %s28, %s44
      %p46 = scmp.eq.s32.totalorder %s20, 0
      %p47 = por %p45, %p46
      %s49 = sadd.s32 %s48, 1
      %p52 = scmp.eq.s32.totalorder %s14, 3
      %p53 = scmp.ne.s32.totalorder %s48, %s50
      %p54 = scmp.eq.s32.totalorder %s14, 0
      %p55 = por %p53, %p54
      %p56 = scmp.ne.s32.totalorder %s48, %s50
      %p57 = scmp.eq.s32.totalorder %s19, 3
      %p58 = por %p56, %p57
      %p59 = scmp.ne.s32.totalorder %s50, %s51
      %p60 = scmp.eq.s32.totalorder %s19, 0
      %p61 = por %p59, %p60
      %p62 = scmp.ne.s32.totalorder %s50, %s51
      %p63 = scmp.eq.s32.totalorder %s20, 3
      %p64 = por %p62, %p63
      %p66 = scmp.ne.s32.totalorder %s51, %s65
      %p67 = scmp.eq.s32.totalorder %s20, 0
      %p68 = por %p66, %p67
      %s70 = sadd.s32 %s69, 1
      %p73 = scmp.eq.s32.totalorder %s14, 3
      %p74 = scmp.ne.s32.totalorder %s69, %s71
      %p75 = scmp.eq.s32.totalorder %s14, 0
      %p76 = por %p74, %p75
      %p77 = scmp.ne.s32.totalorder %s69, %s71
      %p78 = scmp.eq.s32.totalorder %s19, 3
      %p79 = por %p77, %p78
      %p80 = scmp.ne.s32.totalorder %s71, %s72
      %p81 = scmp.eq.s32.totalorder %s19, 0
      %p82 = por %p80, %p81
      %p83 = scmp.ne.s32.totalorder %s71, %s72
      %p84 = scmp.eq.s32.totalorder %s20, 3
      %p85 = por %p83, %p84
      %p87 = scmp.ne.s32.totalorder %s72, %s86
      %p88 = scmp.eq.s32.totalorder %s20, 0
      %p89 = por %p87, %p88
      %s91 = sadd.s32 %s90, 1
      %p94 = scmp.eq.s32.totalorder %s14, 3
      %p95 = scmp.ne.s32.totalorder %s90, %s92
      %p96 = scmp.eq.s32.totalorder %s14, 0
      %p97 = por %p95, %p96
      %p98 = scmp.ne.s32.totalorder %s90, %s92
      %p99 = scmp.eq.s32.totalorder %s19, 3
      %p100 = por %p98, %p99
      %p101 = scmp.ne.s32.totalorder %s92, %s93
      %p102 = scmp.eq.s32.totalorder %s19, 0
      %p103 = por %p101, %p102
      %p104 = scmp.ne.s32.totalorder %s92, %s93
      %p105 = scmp.eq.s32.totalorder %s20, 3
      %p106 = por %p104, %p105
      %p108 = scmp.ne.s32.totalorder %s93, %s107
      %p109 = scmp.eq.s32.totalorder %s20, 0
      %p110 = por %p108, %p109
      %s112 = sadd.s32 %s111, 1
      %p115 = scmp.eq.s32.totalorder %s14, 3
      %p116 = scmp.ne.s32.totalorder %s111, %s113
      %p117 = scmp.eq.s32.totalorder %s14, 0
      %p118 = por %p116, %p117
      %p119 = scmp.ne.s32.totalorder %s111, %s113
      %p120 = scmp.eq.s32.totalorder %s19, 3
      %p121 = por %p119, %p120
      %p122 = scmp.ne.s32.totalorder %s113, %s114
      %p123 = scmp.eq.s32.totalorder %s19, 0
      %p124 = por %p122, %p123
      %p125 = scmp.ne.s32.totalorder %s113, %s114
      %p126 = scmp.eq.s32.totalorder %s20, 3
      %p127 = por %p125, %p126
      %p129 = scmp.ne.s32.totalorder %s114, %s128
      %p130 = scmp.eq.s32.totalorder %s20, 0
      %p131 = por %p129, %p130
      %s132 = ssub.s32 %s14, %s21
      %p133 = scmp.eq.s32.totalorder %s132, 0
      %s135 = sadd.s32 %s134, 1
      %s136 = scalar_select %p133, %s134, %s135
      %p139 = pneg %p133
      %p140 = scmp.eq.s32.totalorder %s14, 3
      %p141 = por %p139, %p140
      %p142 = scmp.ne.s32.totalorder %s134, %s137
      %p143 = scmp.eq.s32.totalorder %s14, 0
      %p144 = por %p142, %p143
      %p145 = scmp.ne.s32.totalorder %s134, %s137
      %p146 = scmp.eq.s32.totalorder %s19, 3
      %p147 = por %p145, %p146
      %p148 = scmp.ne.s32.totalorder %s137, %s138
      %p149 = scmp.eq.s32.totalorder %s19, 0
      %p150 = por %p148, %p149
      %p151 = scmp.ne.s32.totalorder %s137, %s138
      %p152 = scmp.eq.s32.totalorder %s20, 3
      %p153 = por %p151, %p152
      %p155 = scmp.ne.s32.totalorder %s138, %s154
      %p156 = scmp.eq.s32.totalorder %s20, 0
      %p157 = por %p155, %p156
      %p158 = scmp.le.s32.totalorder 1, %s14
      %p159 = scmp.lt.s32.totalorder %s14, 5
      %p160 = pnand %p158, %p159
      %p161 = pneg %p160
      // Predicated region
      $region9: #{tpu_custom_call.1} parent=5 // pred_check
        _
      $region10: #{tpu_custom_call.1} parent=5 // pred_check_branch
        %163 = sbr.rel (%p160) target = $region12
      $region11: #{tpu_custom_call.1} parent=5 // pred_region
        %s164 = ssub.s32 %s14, 1
        // Predicated region
        $region13: #{tpu_custom_call.1} parent=11 // pred_check
          %p165 = pneg %p61
        $region14: #{tpu_custom_call.1} parent=11 // pred_check_branch
          %167 = sbr.rel (%p165) target = $region16
        $region15: #{tpu_custom_call.1} parent=11 // pred_region
          _
        $region16: #{tpu_custom_call.1} parent=11 // pred_fallthru
          _
        // Predicated region
        $region17: #{tpu_custom_call.1} parent=11 // pred_check
          %p168 = pneg %p82
        $region18: #{tpu_custom_call.1} parent=11 // pred_check_branch
          %170 = sbr.rel (%p168) target = $region20
        $region19: #{tpu_custom_call.1} parent=11 // pred_region
          _
        $region20: #{tpu_custom_call.1} parent=11 // pred_fallthru
          _
        // Predicated region
        $region21: #{tpu_custom_call.1} parent=11 // pred_check
          %p171 = pneg %p103
        $region22: #{tpu_custom_call.1} parent=11 // pred_check_branch
          %173 = sbr.rel (%p171) target = $region24
        $region23: #{tpu_custom_call.1} parent=11 // pred_region
          _
        $region24: #{tpu_custom_call.1} parent=11 // pred_fallthru
          _
        // Predicated region
        $region25: #{tpu_custom_call.1} parent=11 // pred_check
          %p174 = pneg %p124
        $region26: #{tpu_custom_call.1} parent=11 // pred_check_branch
          %176 = sbr.rel (%p174) target = $region28
        $region27: #{tpu_custom_call.1} parent=11 // pred_region
          _
        $region28: #{tpu_custom_call.1} parent=11 // pred_fallthru
          _
      $region12: #{tpu_custom_call.1} parent=5 // pred_fallthru
        _
      %p177 = scmp.lt.s32.totalorder %s14, 4
      // Predicated region
      $region29: #{tpu_custom_call.1} parent=5 // pred_check
        %p178 = pneg %p177
      $region30: #{tpu_custom_call.1} parent=5 // pred_check_branch
        %180 = sbr.rel (%p178) target = $region32
      $region31: #{tpu_custom_call.1} parent=5 // pred_region
        // Predicated region
        $region33: #{tpu_custom_call.1} parent=31 // pred_check
          %p181 = pneg %p34
        $region34: #{tpu_custom_call.1} parent=31 // pred_check_branch
          %183 = sbr.rel (%p181) target = $region36
        $region35: #{tpu_custom_call.1} parent=31 // pred_region
          %s184 = smul.u32 2, %s14
          %p185 = scmp.lt.s32.totalorder %s184, 7
          %s186 = scalar_select %p185, %s184, 7
          %s187 = smul.addr %s186, 8
          %s188 = scalar_lea.vmem %s0, %s187
          %s189 = smul.u32 2, %s14
        $region36: #{tpu_custom_call.1} parent=31 // pred_fallthru
          _
      $region32: #{tpu_custom_call.1} parent=5 // pred_fallthru
        _
      %p190 = scmp.le.s32.totalorder 1, %s14
      %p191 = scmp.lt.s32.totalorder %s14, 5
      %p192 = pnand %p190, %p191
      %p193 = pneg %p192
      // Predicated region
      $region37: #{tpu_custom_call.1} parent=5 // pred_check
        _
      $region38: #{tpu_custom_call.1} parent=5 // pred_check_branch
        %195 = sbr.rel (%p192) target = $region40
      $region39: #{tpu_custom_call.1} parent=5 // pred_region
        %s196 = ssub.s32 %s14, 1
        %s197 = smul.u32 2, %s19
        %p198 = scmp.lt.s32.totalorder %s197, 7
        %s199 = scalar_select %p198, %s197, 7
        %s200 = smul.addr %s199, 8
        %s201 = scalar_lea.vmem %s0, %s200
        %p202 = pneg %p40
        %p203 = pneg %p37
        %p204 = pneg %p61
        %p205 = pneg %p58
        %p206 = pneg %p82
        %p207 = pneg %p79
        %p208 = pneg %p103
        %p209 = pneg %p100
        %p210 = pneg %p124
        %p211 = pneg %p121
        %p212 = pneg %p150
        %p213 = pneg %p147
        %s214 = sand.u32 %s137, 1
        %s215 = scalar_lea.sflag [#allocation3], %s214
        %s216 = sand.u32 %s137, 1
        %s217 = smul.addr %s216, 16
        %s218 = scalar_lea.vmem [#allocation2], %s217
        %s219 = smul.u32 2, %s19
        %p220 = scmp.lt.s32.totalorder %s219, 7
        %s221 = scalar_select %p220, %s219, 7
        %s222 = smul.addr %s221, 8
        %s223 = scalar_lea.vmem %s0, %s222
        %s224 = smul.u32 2, %s19
        %s225 = smul.u32 2, %s19
        %v226 = vld [vmem:[%s223] sm:$0xff]
        %v227 = vld [vmem:[%s223 + $0x8] sm:$0xff]
        %v228 = vld [vmem:[%s1] sm:$0xff]
        %v229 = vld [vmem:[%s1 + $0x8] sm:$0xff]
        %v230 = vld [vmem:[%s1 + $0x10] sm:$0xff]
        %v231 = vld [vmem:[%s1 + $0x18] sm:$0xff]
        %v232 = vld [vmem:[%s1 + $0x20] sm:$0xff]
        %v233 = vld [vmem:[%s1 + $0x28] sm:$0xff]
        %v234 = vld [vmem:[%s1 + $0x30] sm:$0xff]
        %v235 = vld [vmem:[%s1 + $0x38] sm:$0xff]
        %v236 = vld [vmem:[%s1 + $0x40] sm:$0xff]
        %v237 = vld [vmem:[%s1 + $0x48] sm:$0xff]
        %v238 = vld [vmem:[%s1 + $0x50] sm:$0xff]
        %v239 = vld [vmem:[%s1 + $0x58] sm:$0xff]
        %v240 = vld [vmem:[%s1 + $0x60] sm:$0xff]
        %v241 = vld [vmem:[%s1 + $0x68] sm:$0xff]
        %v242 = vld [vmem:[%s1 + $0x70] sm:$0xff]
        %v243 = vld [vmem:[%s1 + $0x78] sm:$0xff]
        %v244 = vld [vmem:[%s2] sm:$0x1]
        %v246 = vlaneseq
        %v247 = vshrl.u32 %v246, 7
        %v248 = vsub.s32 0, %v247
        %v249 = vrot.slane %v244, %v248
        %251 = vmatprep.subr.mxu0 0.0
        %252 = vmatpush1.msra.mxu0 %v228
        %253 = vmatprep.subr.mxu0 0.0
        %254 = vmatpush1.msra.mxu0 %v229
        %255 = vmatprep.subr.mxu0 0.0
        %256 = vmatpush1.msra.mxu0 %v230
        %257 = vmatprep.subr.mxu0 0.0
        %258 = vmatpush1.msra.mxu0 %v231
        %259 = vmatprep.subr.mxu0 0.0
        %260 = vmatpush1.msra.mxu0 %v232
        %261 = vmatprep.subr.mxu0 0.0
        %262 = vmatpush1.msra.mxu0 %v233
        %263 = vmatprep.subr.mxu0 0.0
        %264 = vmatpush1.msra.mxu0 %v234
        %265 = vmatprep.subr.mxu0 0.0
        %266 = vmatpush1.msra.mxu0 %v235
        %267 = vmatprep.subr.mxu0 0.0
        %268 = vmatpush1.msra.mxu0 %v236
        %269 = vmatprep.subr.mxu0 0.0
        %270 = vmatpush1.msra.mxu0 %v237
        %271 = vmatprep.subr.mxu0 0.0
        %272 = vmatpush1.msra.mxu0 %v238
        %273 = vmatprep.subr.mxu0 0.0
        %274 = vmatpush1.msra.mxu0 %v239
        %275 = vmatprep.subr.mxu0 0.0
        %276 = vmatpush1.msra.mxu0 %v240
        %277 = vmatprep.subr.mxu0 0.0
        %278 = vmatpush1.msra.mxu0 %v241
        %279 = vmatprep.subr.mxu0 0.0
        %280 = vmatpush1.msra.mxu0 %v242
        %281 = vmatprep.subr.mxu0 0.0
        %282 = vmatpush1.msra.mxu0 %v243
        %283 = vmatprep.subr.mxu0 0.0
        %284 = vmatpush1.msra.mxu0 0.0
        %285 = vmatprep.subr.mxu0 0.0
        %286 = vmatpush1.msra.mxu0 0.0
        %287 = vmatprep.subr.mxu0 0.0
        %288 = vmatpush1.msra.mxu0 0.0
        %289 = vmatprep.subr.mxu0 0.0
        %290 = vmatpush1.msra.mxu0 0.0
        %291 = vmatprep.subr.mxu0 0.0
        %292 = vmatpush1.msra.mxu0 0.0
        %293 = vmatprep.subr.mxu0 0.0
        %294 = vmatpush1.msra.mxu0 0.0
        %295 = vmatprep.subr.mxu0 0.0
        %296 = vmatpush1.msra.mxu0 0.0
        %297 = vmatprep.subr.mxu0 0.0
        %298 = vmatpush1.msra.mxu0 0.0
        %299 = vmatprep.subr.mxu0 0.0
        %300 = vmatpush1.msra.mxu0 0.0
        %301 = vmatprep.subr.mxu0 0.0
        %302 = vmatpush1.msra.mxu0 0.0
        %303 = vmatprep.subr.mxu0 0.0
        %304 = vmatpush1.msra.mxu0 0.0
        %305 = vmatprep.subr.mxu0 0.0
        %306 = vmatpush1.msra.mxu0 0.0
        %307 = vmatprep.subr.mxu0 0.0
        %308 = vmatpush1.msra.mxu0 0.0
        %309 = vmatprep.subr.mxu0 0.0
        %310 = vmatpush1.msra.mxu0 0.0
        %311 = vmatprep.subr.mxu0 0.0
        %312 = vmatpush1.msra.mxu0 0.0
        %313 = vmatprep.subr.mxu0 0.0
        %314 = vmatpush1.msra.mxu0 0.0
        %315 = vmatprep.mubr.f32.mxu0 0.0
        %316 = vmatmul.mubr.f32.gmra.mrb[0].mxu0 %v226
        %v317 = vpop.f32.mrb[0].mxu0
        %v318 = vadd.f32 %v249, %v317
        %v319 = vpop.f32.mrb[0].mxu0
        %320 = vmatprep.mubr.f32.mxu0 0.0
        %321 = vmatmul.mubr.f32.gmra.mrb[0].mxu0 %v227
        %v322 = vpop.f32.mrb[0].mxu0
        %v323 = vadd.f32 %v249, %v322
        %v324 = vpop.f32.mrb[0].mxu0
        %325 = vdwg.mxu0
        %v326 = vmax.f32 %v318, 0.0
        %v327 = vmax.f32 %v323, 0.0
        %v328 = vld [vmem:[%s3] sm:$0xff]
        %v329 = vld [vmem:[%s3 + $0x8] sm:$0xff]
        %v330 = vld [vmem:[%s3 + $0x10] sm:$0xff]
        %v331 = vld [vmem:[%s3 + $0x18] sm:$0xff]
        %v332 = vld [vmem:[%s4] sm:$0x1]
        %v334 = vlaneseq
        %v335 = vshrl.u32 %v334, 7
        %v336 = vsub.s32 0, %v335
        %v337 = vrot.slane %v332, %v336
        %vm339 = vcmask 261120
        %v341 = vsel %vm339, %v326, 0
        %v344 = vsel %vm339, %v327, 0
        %346 = vmatprep.subr.mxu0 0.0
        %347 = vmatpush1.msra.mxu0 %v328
        %348 = vmatprep.subr.mxu0 0.0
        %349 = vmatpush1.msra.mxu0 %v329
        %350 = vmatprep.subr.mxu0 0.0
        %351 = vmatpush1.msra.mxu0 %v330
        %352 = vmatprep.subr.mxu0 0.0
        %353 = vmatpush1.msra.mxu0 %v331
        %354 = vmatprep.subr.mxu0 0.0
        %355 = vmatpush1.msra.mxu0 0.0
        %356 = vmatprep.subr.mxu0 0.0
        %357 = vmatpush1.msra.mxu0 0.0
        %358 = vmatprep.subr.mxu0 0.0
        %359 = vmatpush1.msra.mxu0 0.0
        %360 = vmatprep.subr.mxu0 0.0
        %361 = vmatpush1.msra.mxu0 0.0
        %362 = vmatprep.subr.mxu0 0.0
        %363 = vmatpush1.msra.mxu0 0.0
        %364 = vmatprep.subr.mxu0 0.0
        %365 = vmatpush1.msra.mxu0 0.0
        %366 = vmatprep.subr.mxu0 0.0
        %367 = vmatpush1.msra.mxu0 0.0
        %368 = vmatprep.subr.mxu0 0.0
        %369 = vmatpush1.msra.mxu0 0.0
        %370 = vmatprep.subr.mxu0 0.0
        %371 = vmatpush1.msra.mxu0 0.0
        %372 = vmatprep.subr.mxu0 0.0
        %373 = vmatpush1.msra.mxu0 0.0
        %374 = vmatprep.subr.mxu0 0.0
        %375 = vmatpush1.msra.mxu0 0.0
        %376 = vmatprep.subr.mxu0 0.0
        %377 = vmatpush1.msra.mxu0 0.0
        %378 = vmatprep.subr.mxu0 0.0
        %379 = vmatpush1.msra.mxu0 0.0
        %380 = vmatprep.subr.mxu0 0.0
        %381 = vmatpush1.msra.mxu0 0.0
        %382 = vmatprep.subr.mxu0 0.0
        %383 = vmatpush1.msra.mxu0 0.0
        %384 = vmatprep.subr.mxu0 0.0
        %385 = vmatpush1.msra.mxu0 0.0
        %386 = vmatprep.subr.mxu0 0.0
        %387 = vmatpush1.msra.mxu0 0.0
        %388 = vmatprep.subr.mxu0 0.0
        %389 = vmatpush1.msra.mxu0 0.0
        %390 = vmatprep.subr.mxu0 0.0
        %391 = vmatpush1.msra.mxu0 0.0
        %392 = vmatprep.subr.mxu0 0.0
        %393 = vmatpush1.msra.mxu0 0.0
        %394 = vmatprep.subr.mxu0 0.0
        %395 = vmatpush1.msra.mxu0 0.0
        %396 = vmatprep.subr.mxu0 0.0
        %397 = vmatpush1.msra.mxu0 0.0
        %398 = vmatprep.subr.mxu0 0.0
        %399 = vmatpush1.msra.mxu0 0.0
        %400 = vmatprep.subr.mxu0 0.0
        %401 = vmatpush1.msra.mxu0 0.0
        %402 = vmatprep.subr.mxu0 0.0
        %403 = vmatpush1.msra.mxu0 0.0
        %404 = vmatprep.subr.mxu0 0.0
        %405 = vmatpush1.msra.mxu0 0.0
        %406 = vmatprep.subr.mxu0 0.0
        %407 = vmatpush1.msra.mxu0 0.0
        %408 = vmatprep.subr.mxu0 0.0
        %409 = vmatpush1.msra.mxu0 0.0
        %410 = vmatprep.mubr.f32.mxu0 0.0
        %411 = vmatmul.mubr.f32.gmra.mrb[0].mxu0 %v341
        %v412 = vpop.f32.mrb[0].mxu0
        %v413 = vadd.f32 %v337, %v412
        %v414 = vpop.f32.mrb[0].mxu0
        %415 = vmatprep.mubr.f32.mxu0 0.0
        %416 = vmatmul.mubr.f32.gmra.mrb[0].mxu0 %v344
        %v417 = vpop.f32.mrb[0].mxu0
        %v418 = vadd.f32 %v337, %v417
        %v419 = vpop.f32.mrb[0].mxu0
        %420 = vdwg.mxu0
        %421 = vmax.xlane.f32.xlu0 %v413
        %v422 = vpop.xlane.xlu0 %421
        %423 = vmax.xlane.f32.xlu0 %v418
        %v424 = vpop.xlane.xlu0 %423
        %v425 = vsub.f32 %v413, %v422
        %v426 = vsub.f32 %v418, %v424
        %v427 = vmul.f32 %v425, 1.442695
        %v428 = vpow.pop %v427
        %v429 = vmul.f32 %v426, 1.442695
        %v430 = vpow.pop %v429
        %431 = vadd.xlane.f32.xlu0 %v428
        %v432 = vpop.xlane.xlu0 %431
        %433 = vadd.xlane.f32.xlu0 %v430
        %v434 = vpop.xlane.xlu0 %433
        %v435 = vrcp.pop %v432
        %v436 = vrcp.pop %v434
        %v437 = vmul.f32 %v428, %v435
        %v438 = vmul.f32 %v430, %v436
        %439 = vst [vmem:[%s218] sm:$0xff] %v437
        %440 = vst [vmem:[%s218 + $0x8] sm:$0xff] %v438
        %s441 = sand.u32 %s137, 1
        %s442 = scalar_lea.sflag [#allocation3], %s441
        %s443 = sand.u32 %s137, 1
        %s444 = smul.addr %s443, 16
        %s445 = scalar_lea.vmem [#allocation2], %s444
        // Predicated region
        $region41: #{tpu_custom_call.1} parent=39 // pred_check
          %p446 = pneg %p147
        $region42: #{tpu_custom_call.1} parent=39 // pred_check_branch
          %448 = sbr.rel (%p446) target = $region44
        $region43: #{tpu_custom_call.1} parent=39 // pred_region
          %s449 = smul.u32 2, %s19
          %s451 = ssub.s32 256, 256
          %452 = vsyncadd %s442, %s451
          %s453 = smul.addr %s449, 128
          %s454 = scalar_lea.hbm %s5, %s453
          %s455 = sshll.u32 %s445, 4
          %s456 = int_to_ptr.vmem [resolvable:$true] %s455
          %461 = dma.vmem_to_hbm [thread:$0]  %s456, 256, %s454, %s442, 128, 128, 8
        $region44: #{tpu_custom_call.1} parent=39 // pred_fallthru
          _
      $region40: #{tpu_custom_call.1} parent=5 // pred_fallthru
        _
      %p462 = scmp.le.s32.totalorder 2, %s14
      // Predicated region
      $region45: #{tpu_custom_call.1} parent=5 // pred_check
        %p463 = pneg %p462
      $region46: #{tpu_custom_call.1} parent=5 // pred_check_branch
        %465 = sbr.rel (%p463) target = $region48
      $region47: #{tpu_custom_call.1} parent=5 // pred_region
        %s466 = ssub.s32 %s14, 2
        // Predicated region
        $region49: #{tpu_custom_call.1} parent=47 // pred_check
          %p467 = pneg %p153
        $region50: #{tpu_custom_call.1} parent=47 // pred_check_branch
          %469 = sbr.rel (%p467) target = $region52
        $region51: #{tpu_custom_call.1} parent=47 // pred_region
          %s470 = sand.u32 %s138, 1
          %s471 = scalar_lea.sflag [#allocation3], %s470
          %s472 = sand.u32 %s138, 1
          %s473 = smul.addr %s472, 16
          %s474 = scalar_lea.vmem [#allocation2], %s473
          %475 = dma.done %s471, 256
        $region52: #{tpu_custom_call.1} parent=47 // pred_fallthru
          _
      $region48: #{tpu_custom_call.1} parent=5 // pred_fallthru
        _
    $region6: #{tpu_custom_call.1} parent=1 // loop_footer
      %s18 = sadd.s32 1, %s14
    $region7: #{tpu_custom_call.1} parent=1 // loop_footer_branch
      %13 = sbr.rel target = $region3
    $region8: #{tpu_custom_call.1} parent=1 // loop_exit
      _
    %476 = vsyncpa [#allocation3], 1
    %s477 = scalar_lea.sflag [#allocation3], 1
    %478 = vsyncpa %s477, 1

// kernel: tpu_custom_call.1
$region0: #{tpu_custom_call.1}
  #allocation0 [shape = 'u32[]', space=smem, size = 0x4, offset = 0x4, fixed_abs, tag = 'smem constant byte address 0x4 - core index']
  #allocation1 [shape = 'u32[144,128]{1,0:T(1,128)}', space=vmem, size = 0x12000, scoped, tag = 'internal scratch']
  %s0 = inlined_call_operand.vmem [shape: f32[64,128], index: 0, kind: input, shape index: {}]
  %s1 = inlined_call_operand.vmem [shape: f32[128,32], index: 1, kind: input, shape index: {}]
  %s2 = inlined_call_operand.vmem [shape: f32[1,32], index: 2, kind: input, shape index: {}]
  %s3 = inlined_call_operand.vmem [shape: f32[32,128], index: 3, kind: input, shape index: {}]
  %s4 = inlined_call_operand.vmem [shape: f32[1,128], index: 4, kind: input, shape index: {}]
  %s5 = inlined_call_operand.hbm [shape: f32[64,128], index: 5, kind: output, shape index: {}]
  %s6 = sld [smem:[#allocation0]]
  $region53: #{tpu_custom_call.1} parent=0
    _
  %s8 = ssub.s32 1, %s6
  %s9 = scalar_select 0, %s8, %s6
  $region1: #{tpu_custom_call.1} parent=0
    #allocation2 [shape = 'u8[16384]{0}', space=vmem, size = 0x4000, scoped, tag = 'output window, operand 0']
    #allocation3 [shape = 's32[2]{0}', space=sflag, size = 0x8, scoped, tag = 'scoped memory for tpu_custom_call.1']
    %10 = vsyncpa [#allocation3], 0
    %s11 = scalar_lea.sflag [#allocation3], 1
    %12 = vsyncpa %s11, 0
    loop: start=0, step=1, limit=6
    $region2: #{tpu_custom_call.1} parent=1 // loop_pre_header
      _
    $region3: #{tpu_custom_call.1} parent=1 // loop_header
      %s14 = sphi 0, %s18
      %p15 = scmp.ge.s32.totalorder %s14, 6
      %s24 = sphi 0, %s26
      %s27 = sphi 0, %s24
      %s28 = sphi 0, %s27
      %s44 = sphi 0, %s28
      %s48 = sphi 0, %s48
      %s50 = sphi 0, %s48
      %s51 = sphi 0, %s50
      %s65 = sphi 0, %s51
      %s69 = sphi 0, %s69
      %s71 = sphi 0, %s69
      %s72 = sphi 0, %s71
      %s86 = sphi 0, %s72
      %s90 = sphi 0, %s90
      %s92 = sphi 0, %s90
      %s93 = sphi 0, %s92
      %s107 = sphi 0, %s93
      %s111 = sphi 0, %s111
      %s113 = sphi 0, %s111
      %s114 = sphi 0, %s113
      %s128 = sphi 0, %s114
      %s134 = sphi 0, %s136
      %s137 = sphi 0, %s134
      %s138 = sphi 0, %s137
      %s154 = sphi 0, %s138
    $region4: #{tpu_custom_call.1} parent=1 // loop_header_branch
      %17 = sbr.rel (%p15) target = $region8
    $region5: #{tpu_custom_call.1} parent=1 // loop_body
      %s19 = ssub.s32 %s14, 1
      %s20 = ssub.s32 %s14, 2
      %s21 = sadd.s32 %s14, 1
      %s22 = ssub.s32 %s14, %s21
      %p23 = scmp.eq.s32.totalorder %s22, 0
      %s25 = sadd.s32 %s24, 1
      %s26 = scalar_select %p23, %s24, %s25
      %p29 = pneg %p23
      %p30 = scmp.eq.s32.totalorder %s14, 3
      %p31 = por %p29, %p30
      %p32 = scmp.ne.s32.totalorder %s24, %s27
      %p33 = scmp.eq.s32.totalorder %s14, 0
      %p34 = por %p32, %p33
      %p35 = scmp.ne.s32.totalorder %s24, %s27
      %p36 = scmp.eq.s32.totalorder %s19, 3
      %p37 = por %p35, %p36
      %p38 = scmp.ne.s32.totalorder %s27, %s28
      %p39 = scmp.eq.s32.totalorder %s19, 0
      %p40 = por %p38, %p39
      %p41 = scmp.ne.s32.totalorder %s27, %s28
      %p42 = scmp.eq.s32.totalorder %s20, 3
      %p43 = por %p41, %p42
      %p45 = scmp.ne.s32.totalorder %s28, %s44
      %p46 = scmp.eq.s32.totalorder %s20, 0
      %p47 = por %p45, %p46
      %s49 = sadd.s32 %s48, 1
      %p52 = scmp.eq.s32.totalorder %s14, 3
      %p53 = scmp.ne.s32.totalorder %s48, %s50
      %p54 = scmp.eq.s32.totalorder %s14, 0
      %p55 = por %p53, %p54
      %p56 = scmp.ne.s32.totalorder %s48, %s50
      %p57 = scmp.eq.s32.totalorder %s19, 3
      %p58 = por %p56, %p57
      %p59 = scmp.ne.s32.totalorder %s50, %s51
      %p60 = scmp.eq.s32.totalorder %s19, 0
      %p61 = por %p59, %p60
      %p62 = scmp.ne.s32.totalorder %s50, %s51
      %p63 = scmp.eq.s32.totalorder %s20, 3
      %p64 = por %p62, %p63
      %p66 = scmp.ne.s32.totalorder %s51, %s65
      %p67 = scmp.eq.s32.totalorder %s20, 0
      %p68 = por %p66, %p67
      %s70 = sadd.s32 %s69, 1
      %p73 = scmp.eq.s32.totalorder %s14, 3
      %p74 = scmp.ne.s32.totalorder %s69, %s71
      %p75 = scmp.eq.s32.totalorder %s14, 0
      %p76 = por %p74, %p75
      %p77 = scmp.ne.s32.totalorder %s69, %s71
      %p78 = scmp.eq.s32.totalorder %s19, 3
      %p79 = por %p77, %p78
      %p80 = scmp.ne.s32.totalorder %s71, %s72
      %p81 = scmp.eq.s32.totalorder %s19, 0
      %p82 = por %p80, %p81
      %p83 = scmp.ne.s32.totalorder %s71, %s72
      %p84 = scmp.eq.s32.totalorder %s20, 3
      %p85 = por %p83, %p84
      %p87 = scmp.ne.s32.totalorder %s72, %s86
      %p88 = scmp.eq.s32.totalorder %s20, 0
      %p89 = por %p87, %p88
      %s91 = sadd.s32 %s90, 1
      %p94 = scmp.eq.s32.totalorder %s14, 3
      %p95 = scmp.ne.s32.totalorder %s90, %s92
      %p96 = scmp.eq.s32.totalorder %s14, 0
      %p97 = por %p95, %p96
      %p98 = scmp.ne.s32.totalorder %s90, %s92
      %p99 = scmp.eq.s32.totalorder %s19, 3
      %p100 = por %p98, %p99
      %p101 = scmp.ne.s32.totalorder %s92, %s93
      %p102 = scmp.eq.s32.totalorder %s19, 0
      %p103 = por %p101, %p102
      %p104 = scmp.ne.s32.totalorder %s92, %s93
      %p105 = scmp.eq.s32.totalorder %s20, 3
      %p106 = por %p104, %p105
      %p108 = scmp.ne.s32.totalorder %s93, %s107
      %p109 = scmp.eq.s32.totalorder %s20, 0
      %p110 = por %p108, %p109
      %s112 = sadd.s32 %s111, 1
      %p115 = scmp.eq.s32.totalorder %s14, 3
      %p116 = scmp.ne.s32.totalorder %s111, %s113
      %p117 = scmp.eq.s32.totalorder %s14, 0
      %p118 = por %p116, %p117
      %p119 = scmp.ne.s32.totalorder %s111, %s113
      %p120 = scmp.eq.s32.totalorder %s19, 3
      %p121 = por %p119, %p120
      %p122 = scmp.ne.s32.totalorder %s113, %s114
      %p123 = scmp.eq.s32.totalorder %s19, 0
      %p124 = por %p122, %p123
      %p125 = scmp.ne.s32.totalorder %s113, %s114
      %p126 = scmp.eq.s32.totalorder %s20, 3
      %p127 = por %p125, %p126
      %p129 = scmp.ne.s32.totalorder %s114, %s128
      %p130 = scmp.eq.s32.totalorder %s20, 0
      %p131 = por %p129, %p130
      %s132 = ssub.s32 %s14, %s21
      %p133 = scmp.eq.s32.totalorder %s132, 0
      %s135 = sadd.s32 %s134, 1
      %s136 = scalar_select %p133, %s134, %s135
      %p139 = pneg %p133
      %p140 = scmp.eq.s32.totalorder %s14, 3
      %p141 = por %p139, %p140
      %p142 = scmp.ne.s32.totalorder %s134, %s137
      %p143 = scmp.eq.s32.totalorder %s14, 0
      %p144 = por %p142, %p143
      %p145 = scmp.ne.s32.totalorder %s134, %s137
      %p146 = scmp.eq.s32.totalorder %s19, 3
      %p147 = por %p145, %p146
      %p148 = scmp.ne.s32.totalorder %s137, %s138
      %p149 = scmp.eq.s32.totalorder %s19, 0
      %p150 = por %p148, %p149
      %p151 = scmp.ne.s32.totalorder %s137, %s138
      %p152 = scmp.eq.s32.totalorder %s20, 3
      %p153 = por %p151, %p152
      %p155 = scmp.ne.s32.totalorder %s138, %s154
      %p156 = scmp.eq.s32.totalorder %s20, 0
      %p157 = por %p155, %p156
      %p158 = scmp.le.s32.totalorder 1, %s14
      %p159 = scmp.lt.s32.totalorder %s14, 5
      %p160 = pnand %p158, %p159
      %p161 = pneg %p160
      // Predicated region
      $region9: #{tpu_custom_call.1} parent=5 // pred_check
        _
      $region10: #{tpu_custom_call.1} parent=5 // pred_check_branch
        %163 = sbr.rel (%p160) target = $region12
      $region11: #{tpu_custom_call.1} parent=5 // pred_region
        %s164 = ssub.s32 %s14, 1
        // Predicated region
        $region13: #{tpu_custom_call.1} parent=11 // pred_check
          %p165 = pneg %p61
        $region14: #{tpu_custom_call.1} parent=11 // pred_check_branch
          %167 = sbr.rel (%p165) target = $region16
        $region15: #{tpu_custom_call.1} parent=11 // pred_region
          _
        $region16: #{tpu_custom_call.1} parent=11 // pred_fallthru
          _
        // Predicated region
        $region17: #{tpu_custom_call.1} parent=11 // pred_check
          %p168 = pneg %p82
        $region18: #{tpu_custom_call.1} parent=11 // pred_check_branch
          %170 = sbr.rel (%p168) target = $region20
        $region19: #{tpu_custom_call.1} parent=11 // pred_region
          _
        $region20: #{tpu_custom_call.1} parent=11 // pred_fallthru
          _
        // Predicated region
        $region21: #{tpu_custom_call.1} parent=11 // pred_check
          %p171 = pneg %p103
        $region22: #{tpu_custom_call.1} parent=11 // pred_check_branch
          %173 = sbr.rel (%p171) target = $region24
        $region23: #{tpu_custom_call.1} parent=11 // pred_region
          _
        $region24: #{tpu_custom_call.1} parent=11 // pred_fallthru
          _
        // Predicated region
        $region25: #{tpu_custom_call.1} parent=11 // pred_check
          %p174 = pneg %p124
        $region26: #{tpu_custom_call.1} parent=11 // pred_check_branch
          %176 = sbr.rel (%p174) target = $region28
        $region27: #{tpu_custom_call.1} parent=11 // pred_region
          _
        $region28: #{tpu_custom_call.1} parent=11 // pred_fallthru
          _
      $region12: #{tpu_custom_call.1} parent=5 // pred_fallthru
        _
      %p177 = scmp.lt.s32.totalorder %s14, 4
      // Predicated region
      $region29: #{tpu_custom_call.1} parent=5 // pred_check
        %p178 = pneg %p177
      $region30: #{tpu_custom_call.1} parent=5 // pred_check_branch
        %180 = sbr.rel (%p178) target = $region32
      $region31: #{tpu_custom_call.1} parent=5 // pred_region
        // Predicated region
        $region33: #{tpu_custom_call.1} parent=31 // pred_check
          %p181 = pneg %p34
        $region34: #{tpu_custom_call.1} parent=31 // pred_check_branch
          %183 = sbr.rel (%p181) target = $region36
        $region35: #{tpu_custom_call.1} parent=31 // pred_region
          %s184 = smul.u32 2, %s14
          %p185 = scmp.lt.s32.totalorder %s184, 7
          %s186 = scalar_select %p185, %s184, 7
          %s187 = smul.addr %s186, 8
          %s188 = scalar_lea.vmem %s0, %s187
          %s189 = smul.u32 2, %s14
        $region36: #{tpu_custom_call.1} parent=31 // pred_fallthru
          _
      $region32: #{tpu_custom_call.1} parent=5 // pred_fallthru
        _
      %p190 = scmp.le.s32.totalorder 1, %s14
      %p191 = scmp.lt.s32.totalorder %s14, 5
      %p192 = pnand %p190, %p191
      %p193 = pneg %p192
      // Predicated region
      $region37: #{tpu_custom_call.1} parent=5 // pred_check
        _
      $region38: #{tpu_custom_call.1} parent=5 // pred_check_branch
        %195 = sbr.rel (%p192) target = $region40
      $region39: #{tpu_custom_call.1} parent=5 // pred_region
        %s196 = ssub.s32 %s14, 1
        %s197 = smul.u32 2, %s19
        %p198 = scmp.lt.s32.totalorder %s197, 7
        %s199 = scalar_select %p198, %s197, 7
        %s200 = smul.addr %s199, 8
        %s201 = scalar_lea.vmem %s0, %s200
        %p202 = pneg %p40
        %p203 = pneg %p37
        %p204 = pneg %p61
        %p205 = pneg %p58
        %p206 = pneg %p82
        %p207 = pneg %p79
        %p208 = pneg %p103
        %p209 = pneg %p100
        %p210 = pneg %p124
        %p211 = pneg %p121
        %p212 = pneg %p150
        %p213 = pneg %p147
        %s214 = sand.u32 %s137, 1
        %s215 = scalar_lea.sflag [#allocation3], %s214
        %s216 = sand.u32 %s137, 1
        %s217 = smul.addr %s216, 16
        %s218 = scalar_lea.vmem [#allocation2], %s217
        %s219 = smul.u32 2, %s19
        %p220 = scmp.lt.s32.totalorder %s219, 7
        %s221 = scalar_select %p220, %s219, 7
        %s222 = smul.addr %s221, 8
        %s223 = scalar_lea.vmem %s0, %s222
        %s224 = smul.u32 2, %s19
        %s225 = smul.u32 2, %s19
        %v226 = vld [vmem:[%s223] sm:$0xff]
        %v227 = vld [vmem:[%s223 + $0x8] sm:$0xff]
        %v228 = vld [vmem:[%s1] sm:$0xff]
        %v229 = vld [vmem:[%s1 + $0x8] sm:$0xff]
        %v230 = vld [vmem:[%s1 + $0x10] sm:$0xff]
        %v231 = vld [vmem:[%s1 + $0x18] sm:$0xff]
        %v232 = vld [vmem:[%s1 + $0x20] sm:$0xff]
        %v233 = vld [vmem:[%s1 + $0x28] sm:$0xff]
        %v234 = vld [vmem:[%s1 + $0x30] sm:$0xff]
        %v235 = vld [vmem:[%s1 + $0x38] sm:$0xff]
        %v236 = vld [vmem:[%s1 + $0x40] sm:$0xff]
        %v237 = vld [vmem:[%s1 + $0x48] sm:$0xff]
        %v238 = vld [vmem:[%s1 + $0x50] sm:$0xff]
        %v239 = vld [vmem:[%s1 + $0x58] sm:$0xff]
        %v240 = vld [vmem:[%s1 + $0x60] sm:$0xff]
        %v241 = vld [vmem:[%s1 + $0x68] sm:$0xff]
        %v242 = vld [vmem:[%s1 + $0x70] sm:$0xff]
        %v243 = vld [vmem:[%s1 + $0x78] sm:$0xff]
        %v244 = vld [vmem:[%s2] sm:$0x1]
        %v246 = vlaneseq
        %v247 = vshrl.u32 %v246, 7
        %v248 = vsub.s32 0, %v247
        %v249 = vrot.slane %v244, %v248
        %251 = vmatprep.subr.mxu0 0.0
        %252 = vmatpush1.msra.mxu0 %v228
        %253 = vmatprep.subr.mxu0 0.0
        %254 = vmatpush1.msra.mxu0 %v229
        %255 = vmatprep.subr.mxu0 0.0
        %256 = vmatpush1.msra.mxu0 %v230
        %257 = vmatprep.subr.mxu0 0.0
        %258 = vmatpush1.msra.mxu0 %v231
        %259 = vmatprep.subr.mxu0 0.0
        %260 = vmatpush1.msra.mxu0 %v232
        %261 = vmatprep.subr.mxu0 0.0
        %262 = vmatpush1.msra.mxu0 %v233
        %263 = vmatprep.subr.mxu0 0.0
        %264 = vmatpush1.msra.mxu0 %v234
        %265 = vmatprep.subr.mxu0 0.0
        %266 = vmatpush1.msra.mxu0 %v235
        %267 = vmatprep.subr.mxu0 0.0
        %268 = vmatpush1.msra.mxu0 %v236
        %269 = vmatprep.subr.mxu0 0.0
        %270 = vmatpush1.msra.mxu0 %v237
        %271 = vmatprep.subr.mxu0 0.0
        %272 = vmatpush1.msra.mxu0 %v238
        %273 = vmatprep.subr.mxu0 0.0
        %274 = vmatpush1.msra.mxu0 %v239
        %275 = vmatprep.subr.mxu0 0.0
        %276 = vmatpush1.msra.mxu0 %v240
        %277 = vmatprep.subr.mxu0 0.0
        %278 = vmatpush1.msra.mxu0 %v241
        %279 = vmatprep.subr.mxu0 0.0
        %280 = vmatpush1.msra.mxu0 %v242
        %281 = vmatprep.subr.mxu0 0.0
        %282 = vmatpush1.msra.mxu0 %v243
        %283 = vmatprep.subr.mxu0 0.0
        %284 = vmatpush1.msra.mxu0 0.0
        %285 = vmatprep.subr.mxu0 0.0
        %286 = vmatpush1.msra.mxu0 0.0
        %287 = vmatprep.subr.mxu0 0.0
        %288 = vmatpush1.msra.mxu0 0.0
        %289 = vmatprep.subr.mxu0 0.0
        %290 = vmatpush1.msra.mxu0 0.0
        %291 = vmatprep.subr.mxu0 0.0
        %292 = vmatpush1.msra.mxu0 0.0
        %293 = vmatprep.subr.mxu0 0.0
        %294 = vmatpush1.msra.mxu0 0.0
        %295 = vmatprep.subr.mxu0 0.0
        %296 = vmatpush1.msra.mxu0 0.0
        %297 = vmatprep.subr.mxu0 0.0
        %298 = vmatpush1.msra.mxu0 0.0
        %299 = vmatprep.subr.mxu0 0.0
        %300 = vmatpush1.msra.mxu0 0.0
        %301 = vmatprep.subr.mxu0 0.0
        %302 = vmatpush1.msra.mxu0 0.0
        %303 = vmatprep.subr.mxu0 0.0
        %304 = vmatpush1.msra.mxu0 0.0
        %305 = vmatprep.subr.mxu0 0.0
        %306 = vmatpush1.msra.mxu0 0.0
        %307 = vmatprep.subr.mxu0 0.0
        %308 = vmatpush1.msra.mxu0 0.0
        %309 = vmatprep.subr.mxu0 0.0
        %310 = vmatpush1.msra.mxu0 0.0
        %311 = vmatprep.subr.mxu0 0.0
        %312 = vmatpush1.msra.mxu0 0.0
        %313 = vmatprep.subr.mxu0 0.0
        %314 = vmatpush1.msra.mxu0 0.0
        %315 = vmatprep.mubr.f32.mxu0 0.0
        %316 = vmatmul.mubr.f32.gmra.mrb[0].mxu0 %v226
        %v317 = vpop.f32.mrb[0].mxu0
        %v318 = vadd.f32 %v249, %v317
        %v319 = vpop.f32.mrb[0].mxu0
        %320 = vmatprep.mubr.f32.mxu0 0.0
        %321 = vmatmul.mubr.f32.gmra.mrb[0].mxu0 %v227
        %v322 = vpop.f32.mrb[0].mxu0
        %v323 = vadd.f32 %v249, %v322
        %v324 = vpop.f32.mrb[0].mxu0
        %325 = vdwg.mxu0
        %v326 = vmax.f32 %v318, 0.0
        %v327 = vmax.f32 %v323, 0.0
        %v328 = vld [vmem:[%s3] sm:$0xff]
        %v329 = vld [vmem:[%s3 + $0x8] sm:$0xff]
        %v330 = vld [vmem:[%s3 + $0x10] sm:$0xff]
        %v331 = vld [vmem:[%s3 + $0x18] sm:$0xff]
        %v332 = vld [vmem:[%s4] sm:$0x1]
        %v334 = vlaneseq
        %v335 = vshrl.u32 %v334, 7
        %v336 = vsub.s32 0, %v335
        %v337 = vrot.slane %v332, %v336
        %vm339 = vcmask 261120
        %v341 = vsel %vm339, %v326, 0
        %v344 = vsel %vm339, %v327, 0
        %346 = vmatprep.subr.mxu0 0.0
        %347 = vmatpush1.msra.mxu0 %v328
        %348 = vmatprep.subr.mxu0 0.0
        %349 = vmatpush1.msra.mxu0 %v329
        %350 = vmatprep.subr.mxu0 0.0
        %351 = vmatpush1.msra.mxu0 %v330
        %352 = vmatprep.subr.mxu0 0.0
        %353 = vmatpush1.msra.mxu0 %v331
        %354 = vmatprep.subr.mxu0 0.0
        %355 = vmatpush1.msra.mxu0 0.0
        %356 = vmatprep.subr.mxu0 0.0
        %357 = vmatpush1.msra.mxu0 0.0
        %358 = vmatprep.subr.mxu0 0.0
        %359 = vmatpush1.msra.mxu0 0.0
        %360 = vmatprep.subr.mxu0 0.0
        %361 = vmatpush1.msra.mxu0 0.0
        %362 = vmatprep.subr.mxu0 0.0
        %363 = vmatpush1.msra.mxu0 0.0
        %364 = vmatprep.subr.mxu0 0.0
        %365 = vmatpush1.msra.mxu0 0.0
        %366 = vmatprep.subr.mxu0 0.0
        %367 = vmatpush1.msra.mxu0 0.0
        %368 = vmatprep.subr.mxu0 0.0
        %369 = vmatpush1.msra.mxu0 0.0
        %370 = vmatprep.subr.mxu0 0.0
        %371 = vmatpush1.msra.mxu0 0.0
        %372 = vmatprep.subr.mxu0 0.0
        %373 = vmatpush1.msra.mxu0 0.0
        %374 = vmatprep.subr.mxu0 0.0
        %375 = vmatpush1.msra.mxu0 0.0
        %376 = vmatprep.subr.mxu0 0.0
        %377 = vmatpush1.msra.mxu0 0.0
        %378 = vmatprep.subr.mxu0 0.0
        %379 = vmatpush1.msra.mxu0 0.0
        %380 = vmatprep.subr.mxu0 0.0
        %381 = vmatpush1.msra.mxu0 0.0
        %382 = vmatprep.subr.mxu0 0.0
        %383 = vmatpush1.msra.mxu0 0.0
        %384 = vmatprep.subr.mxu0 0.0
        %385 = vmatpush1.msra.mxu0 0.0
        %386 = vmatprep.subr.mxu0 0.0
        %387 = vmatpush1.msra.mxu0 0.0
        %388 = vmatprep.subr.mxu0 0.0
        %389 = vmatpush1.msra.mxu0 0.0
        %390 = vmatprep.subr.mxu0 0.0
        %391 = vmatpush1.msra.mxu0 0.0
        %392 = vmatprep.subr.mxu0 0.0
        %393 = vmatpush1.msra.mxu0 0.0
        %394 = vmatprep.subr.mxu0 0.0
        %395 = vmatpush1.msra.mxu0 0.0
        %396 = vmatprep.subr.mxu0 0.0
        %397 = vmatpush1.msra.mxu0 0.0
        %398 = vmatprep.subr.mxu0 0.0
        %399 = vmatpush1.msra.mxu0 0.0
        %400 = vmatprep.subr.mxu0 0.0
        %401 = vmatpush1.msra.mxu0 0.0
        %402 = vmatprep.subr.mxu0 0.0
        %403 = vmatpush1.msra.mxu0 0.0
        %404 = vmatprep.subr.mxu0 0.0
        %405 = vmatpush1.msra.mxu0 0.0
        %406 = vmatprep.subr.mxu0 0.0
        %407 = vmatpush1.msra.mxu0 0.0
        %408 = vmatprep.subr.mxu0 0.0
        %409 = vmatpush1.msra.mxu0 0.0
        %410 = vmatprep.mubr.f32.mxu0 0.0
        %411 = vmatmul.mubr.f32.gmra.mrb[0].mxu0 %v341
        %v412 = vpop.f32.mrb[0].mxu0
        %v413 = vadd.f32 %v337, %v412
        %v414 = vpop.f32.mrb[0].mxu0
        %415 = vmatprep.mubr.f32.mxu0 0.0
        %416 = vmatmul.mubr.f32.gmra.mrb[0].mxu0 %v344
        %v417 = vpop.f32.mrb[0].mxu0
        %v418 = vadd.f32 %v337, %v417
        %v419 = vpop.f32.mrb[0].mxu0
        %420 = vdwg.mxu0
        %421 = vmax.xlane.f32.xlu0 %v413
        %v422 = vpop.xlane.xlu0 %421
        %423 = vmax.xlane.f32.xlu0 %v418
        %v424 = vpop.xlane.xlu0 %423
        %v425 = vsub.f32 %v413, %v422
        %v426 = vsub.f32 %v418, %v424
        %v427 = vmul.f32 %v425, 1.442695
        %v428 = vpow.pop %v427
        %v429 = vmul.f32 %v426, 1.442695
        %v430 = vpow.pop %v429
        %431 = vadd.xlane.f32.xlu0 %v428
        %v432 = vpop.xlane.xlu0 %431
        %433 = vadd.xlane.f32.xlu0 %v430
        %v434 = vpop.xlane.xlu0 %433
        %v435 = vrcp.pop %v432
        %v436 = vrcp.pop %v434
        %v437 = vmul.f32 %v428, %v435
        %v438 = vmul.f32 %v430, %v436
        %439 = vst [vmem:[%s218] sm:$0xff] %v437
        %440 = vst [vmem:[%s218 + $0x8] sm:$0xff] %v438
        %s441 = sand.u32 %s137, 1
        %s442 = scalar_lea.sflag [#allocation3], %s441
        %s443 = sand.u32 %s137, 1
        %s444 = smul.addr %s443, 16
        %s445 = scalar_lea.vmem [#allocation2], %s444
        // Predicated region
        $region41: #{tpu_custom_call.1} parent=39 // pred_check
          %p446 = pneg %p147
        $region42: #{tpu_custom_call.1} parent=39 // pred_check_branch
          %448 = sbr.rel (%p446) target = $region44
        $region43: #{tpu_custom_call.1} parent=39 // pred_region
          %s449 = smul.u32 2, %s19
          %s451 = ssub.s32 256, 256
          %452 = vsyncadd %s442, %s451
          %s453 = smul.addr %s449, 128
          %s454 = scalar_lea.hbm %s5, %s453
          %s455 = sshll.u32 %s445, 4
          %s456 = int_to_ptr.vmem [resolvable:$true] %s455
          %461 = dma.vmem_to_hbm [thread:$0]  %s456, 256, %s454, %s442, 128, 128, 8
        $region44: #{tpu_custom_call.1} parent=39 // pred_fallthru
          _
      $region40: #{tpu_custom_call.1} parent=5 // pred_fallthru
        _
      %p462 = scmp.le.s32.totalorder 2, %s14
      // Predicated region
      $region45: #{tpu_custom_call.1} parent=5 // pred_check
        %p463 = pneg %p462
      $region46: #{tpu_custom_call.1} parent=5 // pred_check_branch
        %465 = sbr.rel (%p463) target = $region48
      $region47: #{tpu_custom_call.1} parent=5 // pred_region
        %s466 = ssub.s32 %s14, 2
        // Predicated region
        $region49: #{tpu_custom_call.1} parent=47 // pred_check
          %p467 = pneg %p153
        $region50: #{tpu_custom_call.1} parent=47 // pred_check_branch
          %469 = sbr.rel (%p467) target = $region52
        $region51: #{tpu_custom_call.1} parent=47 // pred_region
          %s470 = sand.u32 %s138, 1
          %s471 = scalar_lea.sflag [#allocation3], %s470
          %s472 = sand.u32 %s138, 1
          %s473 = smul.addr %s472, 16
          %s474 = scalar_lea.vmem [#allocation2], %s473
          %475 = dma.done %s471, 256
        $region52: #{tpu_custom_call.1} parent=47 // pred_fallthru
          _
      $region48: #{tpu_custom_call.1} parent=5 // pred_fallthru
        _
    $region6: #{tpu_custom_call.1} parent=1 // loop_footer
      %s18 = sadd.s32 1, %s14
    $region7: #{tpu_custom_call.1} parent=1 // loop_footer_branch
      %13 = sbr.rel target = $region3
    $region8: #{tpu_custom_call.1} parent=1 // loop_exit
      _
    %476 = vsyncpa [#allocation3], 1
    %s477 = scalar_lea.sflag [#allocation3], 1
    %478 = vsyncpa %s477, 1

</llo_original>
